<compile_context>
chip_gen: v7x
topology: tpu7x:2x2x1
jax: 0.10.0
libtpu: 0.0.40
codegen_flags: <defaults>
</compile_context>

<pallas_src>
import numpy as np
import jax
import jax.numpy as jnp
from jax import lax
from jax.experimental import pallas as pl
from jax.experimental.pallas import tpu as pltpu


def fourier_kernel(values_ref, out_ref):
    # values_ref: (TB, TS)      float32, TS on lanes
    # out_ref   : (TB, 2F, TS)  out dtype, TS on lanes (lane-dense store)
    two_f = out_ref.shape[1]
    F = two_f // 2

    v = values_ref[...]  # (TB, TS)

    def exact_pow2(k_int):
        # 2**k for small non-negative integer k, exact in f32: build the IEEE
        # bit pattern directly (exponent = k + 127, zero mantissa).
        return pltpu.bitcast((k_int + 127) << 23, jnp.float32)

    if F % 8 == 0:
        # Sublane-aligned halves: compute emb once over F sublanes, then two
        # full-lane, sublane-aligned slice stores (no concat temp, no doubled
        # transcendental work).
        k = lax.broadcasted_iota(jnp.int32, (1, F, 1), 1)        # 0..F-1 on sublanes
        freqs = np.float32(np.pi) * exact_pow2(k)                # (1, F, 1)
        emb = v[:, None, :] * freqs                              # (TB, F, TS)
        out_ref[:, :F, :] = jnp.sin(emb).astype(out_ref.dtype)
        out_ref[:, F:, :] = jnp.cos(emb).astype(out_ref.dtype)
    else:
        # Unaligned F: single full-block select + store (avoids sublane-
        # misaligned slice writes).  For small F both branches round to the
        # same vreg count anyway.
        k2 = lax.broadcasted_iota(jnp.int32, (1, two_f, 1), 1)   # 0..2F-1 on sublanes
        is_sin = k2 < F
        k = jnp.where(is_sin, k2, k2 - F)                        # frequency index
        freqs = np.float32(np.pi) * exact_pow2(k)                # (1, 2F, 1)
        emb = v[:, None, :] * freqs                              # (TB, 2F, TS)
        res = jnp.where(is_sin, jnp.sin(emb), jnp.cos(emb))
        out_ref[...] = res.astype(out_ref.dtype)


def _pick_tile(dim: int, align: int, max_tile: int) -> int:
    """Largest multiple of `align` that divides `dim` and is <= max_tile.

    Falls back to the full dim (always a legal block dim) when `dim` is not a
    multiple of `align`.
    """
    if dim % align != 0:
        return dim
    t = min(dim, max(align, (max_tile // align) * align))
    while dim % t != 0:
        t -= align
    return t


def fourier_feature_mapping(values: jax.Array, num_frequencies: int, *,
                            tile_b: int | None = None,
                            tile_s: int | None = None,
                            out_dtype=jnp.float32,
                            out_buffering: int | None = None) -> jax.Array:
    """values: (..., S) -> (..., S, 2*num_frequencies)."""
    F = int(num_frequencies)
    # (k+127)<<23 exponent trick needs k <= 127 (pi*2^k overflows f32 long before
    # that matters in practice anyway).
    assert 1 <= F <= 128, F

    orig_shape = values.shape
    if values.ndim == 1:
        values2d = values.reshape(1, -1)
    else:
        values2d = values.reshape(-1, orig_shape[-1])
    values2d = values2d.astype(jnp.float32)
    B, S = values2d.shape

    out_itemsize = jnp.dtype(out_dtype).itemsize

    # --- tile selection: sublane(8)/lane(128) aligned, ~4 MiB output block ---
    if tile_s is None:
        tile_s = _pick_tile(S, 128, 1024)
    if tile_b is None:
        out_row_bytes = tile_s * 2 * F * out_itemsize
        max_tb = max(8, (4 * 1024 * 1024) // max(out_row_bytes, 1))
        tile_b = _pick_tile(B, 8, max_tb)

    # Ensure enough grid steps to feed both v7x TensorCores and to actually
    # pipeline HBM writeback against compute (>= ~8 steps when possible).
    def n_steps(tb, ts):
        return (B // tb) * (S // ts)

    while n_steps(tile_b, tile_s) < 8:
        if tile_s % 256 == 0:          # stays a multiple of 128 and divides S
            tile_s //= 2
        elif tile_b % 16 == 0:         # stays a multiple of 8 and divides B
            tile_b //= 2
        else:
            break

    assert B % tile_b == 0 and S % tile_s == 0, (B, S, tile_b, tile_s)
    grid = (B // tile_b, S // tile_s)

    cost = pl.CostEstimate(
        flops=10 * B * S * 2 * F,                 # multiply + range reduction est.
        transcendentals=B * S * 2 * F,            # one sin/cos per output element
        bytes_accessed=4 * B * S + B * S * 2 * F * out_itemsize,
    )

    out_block = (tile_b, 2 * F, tile_s)
    if out_buffering is None:
        out_spec = pl.BlockSpec(out_block, lambda i, j: (i, 0, j))
    else:
        # Optional deeper output buffering (sweep 2 vs 3 if profiling shows
        # exposed writeback, e.g. on v6e).
        out_spec = pl.BlockSpec(out_block, lambda i, j: (i, 0, j),
                                pipeline_mode=pl.Buffered(out_buffering))

    # Kernel computes/stores the lane-dense (B, 2F, S) layout.
    out_t = pl.pallas_call(
        fourier_kernel,
        out_shape=jax.ShapeDtypeStruct((B, 2 * F, S), out_dtype),
        grid_spec=pltpu.PrefetchScalarGridSpec(
            num_scalar_prefetch=0,
            grid=grid,
            in_specs=[pl.BlockSpec((tile_b, tile_s), lambda i, j: (i, j))],
            out_specs=out_spec,
        ),
        compiler_params=pltpu.CompilerParams(
            dimension_semantics=("parallel", "parallel"),
            vmem_limit_bytes=32 * 1024 * 1024),
        cost_estimate=cost,
    )(values2d)

    # One XLA transpose back to the module's (..., S, 2F) layout
    # (review-sanctioned; fuse into the consumer instead if it accepts (B,2F,S)).
    out = jnp.moveaxis(out_t, 1, 2)               # (B, S, 2F)
    return out.reshape(orig_shape + (2 * F,))


def fourier_feature_mapping_ref(values: jax.Array, num_frequencies: int) -> jax.Array:
    """Pure-JAX reference mirroring the PyTorch forward (exact pi*2**k freqs)."""
    freqs = jnp.asarray(np.pi * (2.0 ** np.arange(num_frequencies)), dtype=jnp.float32)
    emb = freqs * values[..., None]
    return jnp.concatenate([jnp.sin(emb), jnp.cos(emb)], axis=-1)


if __name__ == "__main__":
    key = jax.random.PRNGKey(0)

    # Main check: lane-aligned seq, F % 8 == 0 branch (slice stores).
    B, S, F = 2, 256, 16
    values = jax.random.normal(key, (B, S), dtype=jnp.float32)
    out = jax.block_until_ready(fourier_feature_mapping(values, F))
    ref = fourier_feature_mapping_ref(values, F)
    assert out.shape == (B, S, 2 * F), out.shape
    assert jnp.allclose(out, ref, atol=3e-5, rtol=1e-5), \
        float(jnp.max(jnp.abs(out - ref)))

    # Unaligned shapes + F not a multiple of 8 (full-dim blocks, select branch).
    B2, S2, F2 = 3, 100, 4
    values2 = jax.random.normal(jax.random.PRNGKey(1), (B2, S2), dtype=jnp.float32)
    out2 = jax.block_until_ready(fourier_feature_mapping(values2, F2))
    ref2 = fourier_feature_mapping_ref(values2, F2)
    assert out2.shape == (B2, S2, 2 * F2), out2.shape
    assert jnp.allclose(out2, ref2, atol=3e-5, rtol=1e-5), \
        float(jnp.max(jnp.abs(out2 - ref2)))

    # bf16 output path (halves output HBM traffic); dtype-aware tolerance.
    B3, S3, F3 = 2, 128, 16
    values3 = jax.random.normal(jax.random.PRNGKey(2), (B3, S3), dtype=jnp.float32)
    out3 = jax.block_until_ready(
        fourier_feature_mapping(values3, F3, out_dtype=jnp.bfloat16))
    ref3 = fourier_feature_mapping_ref(values3, F3)
    assert out3.shape == (B3, S3, 2 * F3), out3.shape
    assert out3.dtype == jnp.bfloat16
    assert jnp.allclose(out3.astype(jnp.float32), ref3, atol=1e-2, rtol=1e-2), \
        float(jnp.max(jnp.abs(out3.astype(jnp.float32) - ref3)))

    print("KERNEL_OK")
</pallas_src>

<mosaic_0001>
module attributes {stable_mosaic.version = 11 : i64} {
  func.func @fourier_kernel(%arg0: i32, %arg1: i32, %arg2: memref<2x128xf32, #tpu.memory_space<vmem>>, %arg3: memref<2x32x128xf32, #tpu.memory_space<vmem>>) attributes {dimension_semantics = [#tpu.dimension_semantics<parallel>, #tpu.dimension_semantics<parallel>], iteration_bounds = array<i64: 1, 2>, scalar_prefetch = 0 : i64, scratch_operands = 0 : i64, tpu.core_type = #tpu.core_type<tc>, window_params = [{transform_indices = @transform_0, window_bounds = array<i64: 2, 128>}, {transform_indices = @transform_1, window_bounds = array<i64: 2, 32, 128>}]} {
    %c0 = arith.constant 0 : index
    %c0_0 = arith.constant 0 : index
    %0 = vector.load %arg2[%c0, %c0_0] : memref<2x128xf32, #tpu.memory_space<vmem>>, vector<2x128xf32>
    %1 = tpu.iota {dimensions = array<i32: 1>} : vector<1x16x1xi32>
    %c127_i32 = arith.constant 127 : i32
    %2 = vector.broadcast %c127_i32 : i32 to vector<1x16x1xi32>
    %3 = arith.addi %1, %2 : vector<1x16x1xi32>
    %c23_i32 = arith.constant 23 : i32
    %4 = vector.broadcast %c23_i32 : i32 to vector<1x16x1xi32>
    %5 = arith.shli %3, %4 : vector<1x16x1xi32>
    %6 = tpu.bitcast %5 : vector<1x16x1xi32> -> vector<1x16x1xf32>
    %cst = arith.constant 3.14159274 : f32
    %7 = vector.broadcast %cst : f32 to vector<1x16x1xf32>
    %8 = arith.mulf %7, %6 : vector<1x16x1xf32>
    %9 = vector.shape_cast %0 : vector<2x128xf32> to vector<2x1x128xf32>
    %10 = vector.broadcast %9 : vector<2x1x128xf32> to vector<2x16x128xf32>
    %11 = vector.broadcast %8 : vector<1x16x1xf32> to vector<2x16x128xf32>
    %12 = arith.mulf %10, %11 : vector<2x16x128xf32>
    %13 = math.sin %12 : vector<2x16x128xf32>
    %c0_1 = arith.constant 0 : index
    %c0_2 = arith.constant 0 : index
    %c0_3 = arith.constant 0 : index
    %14 = vector.load %arg3[%c0_1, %c0_2, %c0_3] : memref<2x32x128xf32, #tpu.memory_space<vmem>>, vector<2x16x128xf32>
    tpu.vector_store %arg3[%c0_1, %c0_2, %c0_3], %13 {strides = array<i32>} : memref<2x32x128xf32, #tpu.memory_space<vmem>>, vector<2x16x128xf32>,
    %15 = math.cos %12 : vector<2x16x128xf32>
    %c0_4 = arith.constant 0 : index
    %c16 = arith.constant 16 : index
    %c0_5 = arith.constant 0 : index
    %16 = vector.load %arg3[%c0_4, %c16, %c0_5] : memref<2x32x128xf32, #tpu.memory_space<vmem>>, vector<2x16x128xf32>
    tpu.vector_store %arg3[%c0_4, %c16, %c0_5], %15 {strides = array<i32>} : memref<2x32x128xf32, #tpu.memory_space<vmem>>, vector<2x16x128xf32>,
    return
  }
  func.func @transform_0(%arg0: i32, %arg1: i32) -> (i32, i32) {
    %c0_i32 = arith.constant 0 : i32
    return %arg0, %arg1 : i32, i32
  }
  func.func @transform_1(%arg0: i32, %arg1: i32) -> (i32, i32, i32) {
    %c0_i32 = arith.constant 0 : i32
    %c0_i32_0 = arith.constant 0 : i32
    return %arg0, %c0_i32, %arg1 : i32, i32, i32
  }
}

</mosaic_0001>

<llo_original>
// kernel: tpu_custom_call.1
$region0: #{tpu_custom_call.1}
  #allocation0 [shape = 'u32[]', space=smem, size = 0x4, offset = 0x4, fixed_abs, tag = 'smem constant byte address 0x4 - core index']
  #allocation1 [shape = 'u32[144,128]{1,0:T(1,128)}', space=vmem, size = 0x12000, scoped, tag = 'internal scratch']
  %s0 = inlined_call_operand.hbm [shape: f32[2,256], index: 0, kind: input, shape index: {}]
  %s1 = inlined_call_operand.hbm [shape: f32[2,32,256], index: 1, kind: output, shape index: {}]
  %s2 = sld [smem:[#allocation0]]
  $region41: #{tpu_custom_call.1} parent=0
    _
  %s4 = ssub.s32 1, %s2
  %s5 = scalar_select 0, %s4, %s2
  $region1: #{tpu_custom_call.1} parent=0
    #allocation2 [shape = 'u8[2048]{0}', space=vmem, size = 0x800, scoped, tag = 'input window, operand 0']
    #allocation3 [shape = 's32[2]{0}', space=sflag, size = 0x8, scoped, tag = 'scoped memory for tpu_custom_call.1']
    #allocation4 [shape = 's32[2]{0}', space=sflag, size = 0x8, scoped, tag = 'scoped memory for tpu_custom_call.1']
    #allocation5 [shape = 'u8[65536]{0}', space=vmem, size = 0x10000, scoped, tag = 'output window, operand 0']
    %6 = vsyncpa [#allocation3], 0
    %s7 = scalar_lea.sflag [#allocation3], 1
    %8 = vsyncpa %s7, 0
    %9 = vsyncpa [#allocation4], 0
    %s10 = scalar_lea.sflag [#allocation4], 1
    %11 = vsyncpa %s10, 0
    loop: start=0, step=1, limit=4
    $region2: #{tpu_custom_call.1} parent=1 // loop_pre_header
      _
    $region3: #{tpu_custom_call.1} parent=1 // loop_header
      %s13 = sphi 0, %s17
      %p14 = scmp.ge.s32.totalorder %s13, 4
      %s20 = sphi 0, %s32
      %s21 = sphi 0, %s28
      %s22 = sphi 0, %s20
      %s23 = sphi 0, %s21
      %s24 = sphi 0, %s22
      %s25 = sphi 0, %s23
      %s37 = sphi 0, %s39
      %s40 = sphi 0, %s37
      %s41 = sphi 0, %s40
      %s57 = sphi 0, %s41
      %s65 = sphi 0, %s67
      %s68 = sphi 0, %s65
      %s69 = sphi 0, %s68
      %s85 = sphi 0, %s69
    $region4: #{tpu_custom_call.1} parent=1 // loop_header_branch
      %16 = sbr.rel (%p14) target = $region8
    $region5: #{tpu_custom_call.1} parent=1 // loop_body
      %s18 = ssub.s32 %s13, 1
      %s19 = ssub.s32 %s13, 2
      %s26 = sadd.s32 1, %s21
      %p27 = scmp.ge.s32.totalorder %s26, 2
      %s28 = scalar_select %p27, 0, %s26
      %s29 = sadd.s32 1, %s20
      %s30 = scalar_select %p27, %s29, %s20
      %p31 = scmp.ge.s32.totalorder %s30, 1
      %s32 = scalar_select %p31, 0, %s30
      %s33 = ssub.s32 %s20, %s32
      %s34 = ssub.s32 %s21, %s28
      %s35 = sor.u32 %s33, %s34
      %p36 = scmp.eq.s32.totalorder %s35, 0
      %s38 = sadd.s32 %s37, 1
      %s39 = scalar_select %p36, %s37, %s38
      %p42 = pneg %p36
      %p43 = scmp.eq.s32.totalorder %s13, 1
      %p44 = por %p42, %p43
      %p45 = scmp.ne.s32.totalorder %s37, %s40
      %p46 = scmp.eq.s32.totalorder %s13, 0
      %p47 = por %p45, %p46
      %p48 = scmp.ne.s32.totalorder %s37, %s40
      %p49 = scmp.eq.s32.totalorder %s18, 1
      %p50 = por %p48, %p49
      %p51 = scmp.ne.s32.totalorder %s40, %s41
      %p52 = scmp.eq.s32.totalorder %s18, 0
      %p53 = por %p51, %p52
      %p54 = scmp.ne.s32.totalorder %s40, %s41
      %p55 = scmp.eq.s32.totalorder %s19, 1
      %p56 = por %p54, %p55
      %p58 = scmp.ne.s32.totalorder %s41, %s57
      %p59 = scmp.eq.s32.totalorder %s19, 0
      %p60 = por %p58, %p59
      %s61 = ssub.s32 %s20, %s32
      %s62 = ssub.s32 %s21, %s28
      %s63 = sor.u32 %s61, %s62
      %p64 = scmp.eq.s32.totalorder %s63, 0
      %s66 = sadd.s32 %s65, 1
      %s67 = scalar_select %p64, %s65, %s66
      %p70 = pneg %p64
      %p71 = scmp.eq.s32.totalorder %s13, 1
      %p72 = por %p70, %p71
      %p73 = scmp.ne.s32.totalorder %s65, %s68
      %p74 = scmp.eq.s32.totalorder %s13, 0
      %p75 = por %p73, %p74
      %p76 = scmp.ne.s32.totalorder %s65, %s68
      %p77 = scmp.eq.s32.totalorder %s18, 1
      %p78 = por %p76, %p77
      %p79 = scmp.ne.s32.totalorder %s68, %s69
      %p80 = scmp.eq.s32.totalorder %s18, 0
      %p81 = por %p79, %p80
      %p82 = scmp.ne.s32.totalorder %s68, %s69
      %p83 = scmp.eq.s32.totalorder %s19, 1
      %p84 = por %p82, %p83
      %p86 = scmp.ne.s32.totalorder %s69, %s85
      %p87 = scmp.eq.s32.totalorder %s19, 0
      %p88 = por %p86, %p87
      %p89 = scmp.le.s32.totalorder 1, %s13
      %p90 = scmp.lt.s32.totalorder %s13, 3
      %p91 = pnand %p89, %p90
      %p92 = pneg %p91
      // Predicated region
      $region9: #{tpu_custom_call.1} parent=5 // pred_check
        _
      $region10: #{tpu_custom_call.1} parent=5 // pred_check_branch
        %94 = sbr.rel (%p91) target = $region12
      $region11: #{tpu_custom_call.1} parent=5 // pred_region
        %s95 = ssub.s32 %s13, 1
      $region12: #{tpu_custom_call.1} parent=5 // pred_fallthru
        _
      %p96 = scmp.lt.s32.totalorder %s13, 2
      // Predicated region
      $region13: #{tpu_custom_call.1} parent=5 // pred_check
        %p97 = pneg %p96
      $region14: #{tpu_custom_call.1} parent=5 // pred_check_branch
        %99 = sbr.rel (%p97) target = $region16
      $region15: #{tpu_custom_call.1} parent=5 // pred_region
        // Predicated region
        $region17: #{tpu_custom_call.1} parent=15 // pred_check
          %p100 = pneg %p47
        $region18: #{tpu_custom_call.1} parent=15 // pred_check_branch
          %102 = sbr.rel (%p100) target = $region20
        $region19: #{tpu_custom_call.1} parent=15 // pred_region
          %s103 = sand.u32 %s37, 1
          %s104 = scalar_lea.sflag [#allocation3], %s103
          %s105 = sand.u32 %s37, 1
          %s106 = smul.addr %s105, 2
          %s107 = scalar_lea.vmem [#allocation2], %s106
          %s109 = ssub.s32 32, 32
          %110 = vsyncadd %s104, %s109
          %s111 = smul.addr %s20, 2
          %s112 = sadd.s32 %s21, %s111
          %s113 = smul.addr %s112, 32
          %s114 = scalar_lea.hbm %s0, %s113
          %s116 = sshll.u32 %s107, 4
          %s117 = int_to_ptr.vmem [resolvable:$true] %s116
          %119 = dma.hbm_to_vmem [thread:$0]  %s114, 32, %s117, %s104
        $region20: #{tpu_custom_call.1} parent=15 // pred_fallthru
          _
      $region16: #{tpu_custom_call.1} parent=5 // pred_fallthru
        _
      %p120 = scmp.le.s32.totalorder 1, %s13
      %p121 = scmp.lt.s32.totalorder %s13, 3
      %p122 = pnand %p120, %p121
      %p123 = pneg %p122
      // Predicated region
      $region21: #{tpu_custom_call.1} parent=5 // pred_check
        _
      $region22: #{tpu_custom_call.1} parent=5 // pred_check_branch
        %125 = sbr.rel (%p122) target = $region24
      $region23: #{tpu_custom_call.1} parent=5 // pred_region
        %s126 = ssub.s32 %s13, 1
        %s127 = sand.u32 %s40, 1
        %s128 = scalar_lea.sflag [#allocation3], %s127
        %s129 = sand.u32 %s40, 1
        %s130 = smul.addr %s129, 2
        %s131 = scalar_lea.vmem [#allocation2], %s130
        // Predicated region
        $region25: #{tpu_custom_call.1} parent=23 // pred_check
          %p132 = pneg %p53
        $region26: #{tpu_custom_call.1} parent=23 // pred_check_branch
          %134 = sbr.rel (%p132) target = $region28
        $region27: #{tpu_custom_call.1} parent=23 // pred_region
          %135 = dma.done %s128, 32
        $region28: #{tpu_custom_call.1} parent=23 // pred_fallthru
          _
        %s136 = sand.u32 %s40, 1
        %s137 = scalar_lea.sflag [#allocation3], %s136
        %s138 = sand.u32 %s40, 1
        %s139 = smul.addr %s138, 2
        %s140 = scalar_lea.vmem [#allocation2], %s139
        %p141 = pneg %p53
        %p142 = pneg %p50
        %p143 = pneg %p81
        %p144 = pneg %p78
        %s145 = sand.u32 %s68, 1
        %s146 = scalar_lea.sflag [#allocation4], %s145
        %s147 = sand.u32 %s68, 1
        %s148 = smul.addr %s147, 64
        %s149 = scalar_lea.vmem [#allocation5], %s148
        %s150 = smul.u32 2, %s22
        %v151 = vld [vmem:[%s131] sm:$0x3]
        %v152 = vlaneseq
        %v153 = vshrl.u32 %v152, 7
        %v154 = vadd.s32 %v153, 8
        %v155 = vadd.s32 %v153, 127
        %v156 = vadd.s32 %v154, 127
        %v157 = vshll.u32 %v155, 23
        %v158 = vshll.u32 %v156, 23
        %v161 = vmul.f32 %v157, 3.1415927
        %v162 = vmul.f32 %v158, 3.1415927
        %v165 = vunpack.c.l.s4 1966171168
        %v166 = vunpack.c.0.s8 %v165
        %v167 = vlaneseq
        %v168 = vshrl.u32 %v167, 7
        %v169 = vsub.s32 %v166, %v168
        %v170 = vrot.slane %v151, %v169
        %v171 = vcombine.high %v170, %v170
        %v173 = vunpack.c.l.s4 1966171168
        %v174 = vunpack.c.0.s8 %v173
        %v175 = vlaneseq
        %v176 = vshrl.u32 %v175, 7
        %v177 = vsub.s32 %v174, %v176
        %v178 = vrot.slane %v170, %v177
        %v180 = vunpack.c.l.s4 1966171168
        %v181 = vunpack.c.0.s8 %v180
        %v182 = vlaneseq
        %v183 = vshrl.u32 %v182, 7
        %v184 = vsub.s32 %v181, %v183
        %v185 = vrot.slane %v171, %v184
        %v186 = vlaneseq
        %v187 = vshrl.u32 %v186, 7
        %v188 = vsub.s32 0, %v187
        %v189 = vrot.slane %v178, %v188
        %v190 = vlaneseq
        %v191 = vshrl.u32 %v190, 7
        %v192 = vsub.s32 0, %v191
        %v193 = vrot.slane %v185, %v192
        %v196 = vmul.f32 %v189, %v161
        %v197 = vmul.f32 %v189, %v162
        %v198 = vmul.f32 %v193, %v161
        %v199 = vmul.f32 %v193, %v162
        %v200 = vand.u32 2147483647, %v196
        %vm201 = vcmp.le.f32.partialorder %v200, 0.7853982
        %vm202 = vcmp.lt.s32.totalorder %v196, 0
        %v203 = vand.u32 %v196, 2139095040
        %v204 = vshrl.u32 %v203, 23
        %v205 = vsub.s32 %v204, 127
        %v206 = vand.u32 2147483647, %v196
        %v207 = vand.u32 %v206, 8388607
        %v208 = vor.u32 %v207, 8388608
        %v209 = vsub.s32 0, %v208
        %v210 = vadd.s32 %v205, 1
        %vm211 = vcmp.gt.s32.totalorder %v210, 0
        %v212 = vsel %vm211, %v210, 0
        %v213 = vshrl.u32 %v212, 5
        %v214 = vand.u32 %v212, 31
        %v215 = vsub.s32 32, %v214
        %v216 = vshrl.u32 683565275, %v215
        %v217 = vshll.u32 683565275, %v214
        %v218 = vshrl.u32 2475754826, %v215
        %v219 = vor.u32 %v217, %v218
        %v220 = vshll.u32 2475754826, %v214
        %v221 = vshrl.u32 2131351028, %v215
        %v222 = vor.u32 %v220, %v221
        %v223 = vshll.u32 2131351028, %v214
        %v224 = vshrl.u32 2102212464, %v215
        %v225 = vor.u32 %v223, %v224
        %v226 = vshll.u32 2102212464, %v214
        %v227 = vshrl.u32 920167782, %v215
        %v228 = vor.u32 %v226, %v227
        %v229 = vshll.u32 920167782, %v214
        %v230 = vshrl.u32 1326507024, %v215
        %v231 = vor.u32 %v229, %v230
        %vm232 = vcmp.lt.s32.totalorder %v213, 1
        %vm233 = vcmp.lt.s32.totalorder %v213, 2
        %vm234 = vcmp.lt.s32.totalorder %v213, 3
        %vm235 = vcmp.lt.s32.totalorder %v213, 4
        %v236 = vsel %vm232, %v216, %v219
        %v237 = vsel %vm235, %v225, 2102212464
        %v238 = vsel %vm234, %v222, %v237
        %v239 = vsel %vm233, %v236, %v238
        %v240 = vsel %vm232, %v219, %v222
        %v241 = vsel %vm235, %v228, 920167782
        %v242 = vsel %vm234, %v225, %v241
        %v243 = vsel %vm233, %v240, %v242
        %v244 = vsel %vm232, %v222, %v225
        %v245 = vsel %vm235, %v231, 1326507024
        %v246 = vsel %vm234, %v228, %v245
        %v247 = vsel %vm233, %v244, %v246
        %v248 = vshll.u32 %v208, 8
        %v249 = vmul.u32.u64.compose %v248, %v247
        %v250 = vextract.low.u32 %v249
        %v251 = vextract.high.u32 %v249
        %v252 = vmul.u32.u64.compose %v248, %v243
        %v253 = vextract.low.u32 %v252
        %v254 = vextract.high.u32 %v252
        %v255 = vmul.u32 %v248, %v239
        %v256 = vadd.s32 %v251, %v253
        %vm257 = vc.u32 %v251, %v253
        %v258 = vadd.s32 %v254, 1
        %v259 = vsel %vm257, %v258, %v254
        %v260 = vadd.s32 %v255, %v259
        %v261 = vadd.s32 %v260, 536870912
        %v262 = vshrl.u32 %v261, 30
        %v263 = vshll.u32 %v262, 30
        %v264 = vsub.s32 %v260, %v263
        %vm265 = vcmp.lt.s32.totalorder %v264, 0
        %v266 = vsub.s32 0, %v264
        %v267 = vsel %vm265, %v266, %v264
        %v268 = vclz %v267
        %v269 = vsub.s32 %v268, 2
        %vm270 = vcmp.gt.s32.totalorder 0, %v269
        %v271 = vsel %vm270, 0, %v269
        %v272 = vsub.s32 32, %v271
        %v273 = vshll.u32 %v264, %v271
        %v274 = vshrl.u32 %v256, %v272
        %v275 = vor.u32 %v273, %v274
        %v276 = vsub.s32 4294967266, %v271
        %v277 = vadd.s32 %v276, 127
        %v278 = vshll.u32 %v277, 23
        %v279 = vor.u32 4788187, %v278
        %v280 = vand.u32 2147483647, %v279
        %v282 = vcvt.s32.f32 %v275
        %v283 = vmul.f32 %v282, %v280
        %v284 = vxor.u32 %v283, 2147483648
        %v285 = vsel %vm202, %v284, %v283
        %v286 = vsub.s32 4, %v262
        %v287 = vsel %vm202, %v286, %v262
        %v288 = vsel %vm201, %v196, %v285
        %v289 = vsel %vm201, 0, %v287
        %v290 = vcosq.f32.pop %v288
        %v291 = vsinq.f32.pop %v288
        %vm292 = vweird.f32 %v196
        %v293 = vadd.s32 %v289, 3
        %v294 = vand.u32 %v293, 3
        %vm295 = vcmp.lt.s32.totalorder %v294, 2
        %vm296 = vcmp.eq.s32.totalorder %v294, 0
        %v297 = vxor.u32 %v291, 2147483648
        %v298 = vsel %vm296, %v290, %v297
        %vm299 = vcmp.eq.s32.totalorder %v294, 2
        %v300 = vxor.u32 %v290, 2147483648
        %v301 = vsel %vm299, %v300, %v291
        %v302 = vsel %vm295, %v298, %v301
        %v303 = vsel %vm292, nan, %v302
        %v304 = vand.u32 2147483647, %v197
        %vm305 = vcmp.le.f32.partialorder %v304, 0.7853982
        %vm306 = vcmp.lt.s32.totalorder %v197, 0
        %v307 = vand.u32 %v197, 2139095040
        %v308 = vshrl.u32 %v307, 23
        %v309 = vsub.s32 %v308, 127
        %v310 = vand.u32 2147483647, %v197
        %v311 = vand.u32 %v310, 8388607
        %v312 = vor.u32 %v311, 8388608
        %v313 = vsub.s32 0, %v312
        %v314 = vadd.s32 %v309, 1
        %vm315 = vcmp.gt.s32.totalorder %v314, 0
        %v316 = vsel %vm315, %v314, 0
        %v317 = vshrl.u32 %v316, 5
        %v318 = vand.u32 %v316, 31
        %v319 = vsub.s32 32, %v318
        %v320 = vshrl.u32 683565275, %v319
        %v321 = vshll.u32 683565275, %v318
        %v322 = vshrl.u32 2475754826, %v319
        %v323 = vor.u32 %v321, %v322
        %v324 = vshll.u32 2475754826, %v318
        %v325 = vshrl.u32 2131351028, %v319
        %v326 = vor.u32 %v324, %v325
        %v327 = vshll.u32 2131351028, %v318
        %v328 = vshrl.u32 2102212464, %v319
        %v329 = vor.u32 %v327, %v328
        %v330 = vshll.u32 2102212464, %v318
        %v331 = vshrl.u32 920167782, %v319
        %v332 = vor.u32 %v330, %v331
        %v333 = vshll.u32 920167782, %v318
        %v334 = vshrl.u32 1326507024, %v319
        %v335 = vor.u32 %v333, %v334
        %vm336 = vcmp.lt.s32.totalorder %v317, 1
        %vm337 = vcmp.lt.s32.totalorder %v317, 2
        %vm338 = vcmp.lt.s32.totalorder %v317, 3
        %vm339 = vcmp.lt.s32.totalorder %v317, 4
        %v340 = vsel %vm336, %v320, %v323
        %v341 = vsel %vm339, %v329, 2102212464
        %v342 = vsel %vm338, %v326, %v341
        %v343 = vsel %vm337, %v340, %v342
        %v344 = vsel %vm336, %v323, %v326
        %v345 = vsel %vm339, %v332, 920167782
        %v346 = vsel %vm338, %v329, %v345
        %v347 = vsel %vm337, %v344, %v346
        %v348 = vsel %vm336, %v326, %v329
        %v349 = vsel %vm339, %v335, 1326507024
        %v350 = vsel %vm338, %v332, %v349
        %v351 = vsel %vm337, %v348, %v350
        %v352 = vshll.u32 %v312, 8
        %v353 = vmul.u32.u64.compose %v352, %v351
        %v354 = vextract.low.u32 %v353
        %v355 = vextract.high.u32 %v353
        %v356 = vmul.u32.u64.compose %v352, %v347
        %v357 = vextract.low.u32 %v356
        %v358 = vextract.high.u32 %v356
        %v359 = vmul.u32 %v352, %v343
        %v360 = vadd.s32 %v355, %v357
        %vm361 = vc.u32 %v355, %v357
        %v362 = vadd.s32 %v358, 1
        %v363 = vsel %vm361, %v362, %v358
        %v364 = vadd.s32 %v359, %v363
        %v365 = vadd.s32 %v364, 536870912
        %v366 = vshrl.u32 %v365, 30
        %v367 = vshll.u32 %v366, 30
        %v368 = vsub.s32 %v364, %v367
        %vm369 = vcmp.lt.s32.totalorder %v368, 0
        %v370 = vsub.s32 0, %v368
        %v371 = vsel %vm369, %v370, %v368
        %v372 = vclz %v371
        %v373 = vsub.s32 %v372, 2
        %vm374 = vcmp.gt.s32.totalorder 0, %v373
        %v375 = vsel %vm374, 0, %v373
        %v376 = vsub.s32 32, %v375
        %v377 = vshll.u32 %v368, %v375
        %v378 = vshrl.u32 %v360, %v376
        %v379 = vor.u32 %v377, %v378
        %v380 = vsub.s32 4294967266, %v375
        %v381 = vadd.s32 %v380, 127
        %v382 = vshll.u32 %v381, 23
        %v383 = vor.u32 4788187, %v382
        %v384 = vand.u32 2147483647, %v383
        %v386 = vcvt.s32.f32 %v379
        %v387 = vmul.f32 %v386, %v384
        %v388 = vxor.u32 %v387, 2147483648
        %v389 = vsel %vm306, %v388, %v387
        %v390 = vsub.s32 4, %v366
        %v391 = vsel %vm306, %v390, %v366
        %v392 = vsel %vm305, %v197, %v389
        %v393 = vsel %vm305, 0, %v391
        %v394 = vcosq.f32.pop %v392
        %v395 = vsinq.f32.pop %v392
        %vm396 = vweird.f32 %v197
        %v397 = vadd.s32 %v393, 3
        %v398 = vand.u32 %v397, 3
        %vm399 = vcmp.lt.s32.totalorder %v398, 2
        %vm400 = vcmp.eq.s32.totalorder %v398, 0
        %v401 = vxor.u32 %v395, 2147483648
        %v402 = vsel %vm400, %v394, %v401
        %vm403 = vcmp.eq.s32.totalorder %v398, 2
        %v404 = vxor.u32 %v394, 2147483648
        %v405 = vsel %vm403, %v404, %v395
        %v406 = vsel %vm399, %v402, %v405
        %v407 = vsel %vm396, nan, %v406
        %v408 = vand.u32 2147483647, %v198
        %vm409 = vcmp.le.f32.partialorder %v408, 0.7853982
        %vm410 = vcmp.lt.s32.totalorder %v198, 0
        %v411 = vand.u32 %v198, 2139095040
        %v412 = vshrl.u32 %v411, 23
        %v413 = vsub.s32 %v412, 127
        %v414 = vand.u32 2147483647, %v198
        %v415 = vand.u32 %v414, 8388607
        %v416 = vor.u32 %v415, 8388608
        %v417 = vsub.s32 0, %v416
        %v418 = vadd.s32 %v413, 1
        %vm419 = vcmp.gt.s32.totalorder %v418, 0
        %v420 = vsel %vm419, %v418, 0
        %v421 = vshrl.u32 %v420, 5
        %v422 = vand.u32 %v420, 31
        %v423 = vsub.s32 32, %v422
        %v424 = vshrl.u32 683565275, %v423
        %v425 = vshll.u32 683565275, %v422
        %v426 = vshrl.u32 2475754826, %v423
        %v427 = vor.u32 %v425, %v426
        %v428 = vshll.u32 2475754826, %v422
        %v429 = vshrl.u32 2131351028, %v423
        %v430 = vor.u32 %v428, %v429
        %v431 = vshll.u32 2131351028, %v422
        %v432 = vshrl.u32 2102212464, %v423
        %v433 = vor.u32 %v431, %v432
        %v434 = vshll.u32 2102212464, %v422
        %v435 = vshrl.u32 920167782, %v423
        %v436 = vor.u32 %v434, %v435
        %v437 = vshll.u32 920167782, %v422
        %v438 = vshrl.u32 1326507024, %v423
        %v439 = vor.u32 %v437, %v438
        %vm440 = vcmp.lt.s32.totalorder %v421, 1
        %vm441 = vcmp.lt.s32.totalorder %v421, 2
        %vm442 = vcmp.lt.s32.totalorder %v421, 3
        %vm443 = vcmp.lt.s32.totalorder %v421, 4
        %v444 = vsel %vm440, %v424, %v427
        %v445 = vsel %vm443, %v433, 2102212464
        %v446 = vsel %vm442, %v430, %v445
        %v447 = vsel %vm441, %v444, %v446
        %v448 = vsel %vm440, %v427, %v430
        %v449 = vsel %vm443, %v436, 920167782
        %v450 = vsel %vm442, %v433, %v449
        %v451 = vsel %vm441, %v448, %v450
        %v452 = vsel %vm440, %v430, %v433
        %v453 = vsel %vm443, %v439, 1326507024
        %v454 = vsel %vm442, %v436, %v453
        %v455 = vsel %vm441, %v452, %v454
        %v456 = vshll.u32 %v416, 8
        %v457 = vmul.u32.u64.compose %v456, %v455
        %v458 = vextract.low.u32 %v457
        %v459 = vextract.high.u32 %v457
        %v460 = vmul.u32.u64.compose %v456, %v451
        %v461 = vextract.low.u32 %v460
        %v462 = vextract.high.u32 %v460
        %v463 = vmul.u32 %v456, %v447
        %v464 = vadd.s32 %v459, %v461
        %vm465 = vc.u32 %v459, %v461
        %v466 = vadd.s32 %v462, 1
        %v467 = vsel %vm465, %v466, %v462
        %v468 = vadd.s32 %v463, %v467
        %v469 = vadd.s32 %v468, 536870912
        %v470 = vshrl.u32 %v469, 30
        %v471 = vshll.u32 %v470, 30
        %v472 = vsub.s32 %v468, %v471
        %vm473 = vcmp.lt.s32.totalorder %v472, 0
        %v474 = vsub.s32 0, %v472
        %v475 = vsel %vm473, %v474, %v472
        %v476 = vclz %v475
        %v477 = vsub.s32 %v476, 2
        %vm478 = vcmp.gt.s32.totalorder 0, %v477
        %v479 = vsel %vm478, 0, %v477
        %v480 = vsub.s32 32, %v479
        %v481 = vshll.u32 %v472, %v479
        %v482 = vshrl.u32 %v464, %v480
        %v483 = vor.u32 %v481, %v482
        %v484 = vsub.s32 4294967266, %v479
        %v485 = vadd.s32 %v484, 127
        %v486 = vshll.u32 %v485, 23
        %v487 = vor.u32 4788187, %v486
        %v488 = vand.u32 2147483647, %v487
        %v490 = vcvt.s32.f32 %v483
        %v491 = vmul.f32 %v490, %v488
        %v492 = vxor.u32 %v491, 2147483648
        %v493 = vsel %vm410, %v492, %v491
        %v494 = vsub.s32 4, %v470
        %v495 = vsel %vm410, %v494, %v470
        %v496 = vsel %vm409, %v198, %v493
        %v497 = vsel %vm409, 0, %v495
        %v498 = vcosq.f32.pop %v496
        %v499 = vsinq.f32.pop %v496
        %vm500 = vweird.f32 %v198
        %v501 = vadd.s32 %v497, 3
        %v502 = vand.u32 %v501, 3
        %vm503 = vcmp.lt.s32.totalorder %v502, 2
        %vm504 = vcmp.eq.s32.totalorder %v502, 0
        %v505 = vxor.u32 %v499, 2147483648
        %v506 = vsel %vm504, %v498, %v505
        %vm507 = vcmp.eq.s32.totalorder %v502, 2
        %v508 = vxor.u32 %v498, 2147483648
        %v509 = vsel %vm507, %v508, %v499
        %v510 = vsel %vm503, %v506, %v509
        %v511 = vsel %vm500, nan, %v510
        %v512 = vand.u32 2147483647, %v199
        %vm513 = vcmp.le.f32.partialorder %v512, 0.7853982
        %vm514 = vcmp.lt.s32.totalorder %v199, 0
        %v515 = vand.u32 %v199, 2139095040
        %v516 = vshrl.u32 %v515, 23
        %v517 = vsub.s32 %v516, 127
        %v518 = vand.u32 2147483647, %v199
        %v519 = vand.u32 %v518, 8388607
        %v520 = vor.u32 %v519, 8388608
        %v521 = vsub.s32 0, %v520
        %v522 = vadd.s32 %v517, 1
        %vm523 = vcmp.gt.s32.totalorder %v522, 0
        %v524 = vsel %vm523, %v522, 0
        %v525 = vshrl.u32 %v524, 5
        %v526 = vand.u32 %v524, 31
        %v527 = vsub.s32 32, %v526
        %v528 = vshrl.u32 683565275, %v527
        %v529 = vshll.u32 683565275, %v526
        %v530 = vshrl.u32 2475754826, %v527
        %v531 = vor.u32 %v529, %v530
        %v532 = vshll.u32 2475754826, %v526
        %v533 = vshrl.u32 2131351028, %v527
        %v534 = vor.u32 %v532, %v533
        %v535 = vshll.u32 2131351028, %v526
        %v536 = vshrl.u32 2102212464, %v527
        %v537 = vor.u32 %v535, %v536
        %v538 = vshll.u32 2102212464, %v526
        %v539 = vshrl.u32 920167782, %v527
        %v540 = vor.u32 %v538, %v539
        %v541 = vshll.u32 920167782, %v526
        %v542 = vshrl.u32 1326507024, %v527
        %v543 = vor.u32 %v541, %v542
        %vm544 = vcmp.lt.s32.totalorder %v525, 1
        %vm545 = vcmp.lt.s32.totalorder %v525, 2
        %vm546 = vcmp.lt.s32.totalorder %v525, 3
        %vm547 = vcmp.lt.s32.totalorder %v525, 4
        %v548 = vsel %vm544, %v528, %v531
        %v549 = vsel %vm547, %v537, 2102212464
        %v550 = vsel %vm546, %v534, %v549
        %v551 = vsel %vm545, %v548, %v550
        %v552 = vsel %vm544, %v531, %v534
        %v553 = vsel %vm547, %v540, 920167782
        %v554 = vsel %vm546, %v537, %v553
        %v555 = vsel %vm545, %v552, %v554
        %v556 = vsel %vm544, %v534, %v537
        %v557 = vsel %vm547, %v543, 1326507024
        %v558 = vsel %vm546, %v540, %v557
        %v559 = vsel %vm545, %v556, %v558
        %v560 = vshll.u32 %v520, 8
        %v561 = vmul.u32.u64.compose %v560, %v559
        %v562 = vextract.low.u32 %v561
        %v563 = vextract.high.u32 %v561
        %v564 = vmul.u32.u64.compose %v560, %v555
        %v565 = vextract.low.u32 %v564
        %v566 = vextract.high.u32 %v564
        %v567 = vmul.u32 %v560, %v551
        %v568 = vadd.s32 %v563, %v565
        %vm569 = vc.u32 %v563, %v565
        %v570 = vadd.s32 %v566, 1
        %v571 = vsel %vm569, %v570, %v566
        %v572 = vadd.s32 %v567, %v571
        %v573 = vadd.s32 %v572, 536870912
        %v574 = vshrl.u32 %v573, 30
        %v575 = vshll.u32 %v574, 30
        %v576 = vsub.s32 %v572, %v575
        %vm577 = vcmp.lt.s32.totalorder %v576, 0
        %v578 = vsub.s32 0, %v576
        %v579 = vsel %vm577, %v578, %v576
        %v580 = vclz %v579
        %v581 = vsub.s32 %v580, 2
        %vm582 = vcmp.gt.s32.totalorder 0, %v581
        %v583 = vsel %vm582, 0, %v581
        %v584 = vsub.s32 32, %v583
        %v585 = vshll.u32 %v576, %v583
        %v586 = vshrl.u32 %v568, %v584
        %v587 = vor.u32 %v585, %v586
        %v588 = vsub.s32 4294967266, %v583
        %v589 = vadd.s32 %v588, 127
        %v590 = vshll.u32 %v589, 23
        %v591 = vor.u32 4788187, %v590
        %v592 = vand.u32 2147483647, %v591
        %v594 = vcvt.s32.f32 %v587
        %v595 = vmul.f32 %v594, %v592
        %v596 = vxor.u32 %v595, 2147483648
        %v597 = vsel %vm514, %v596, %v595
        %v598 = vsub.s32 4, %v574
        %v599 = vsel %vm514, %v598, %v574
        %v600 = vsel %vm513, %v199, %v597
        %v601 = vsel %vm513, 0, %v599
        %v602 = vcosq.f32.pop %v600
        %v603 = vsinq.f32.pop %v600
        %vm604 = vweird.f32 %v199
        %v605 = vadd.s32 %v601, 3
        %v606 = vand.u32 %v605, 3
        %vm607 = vcmp.lt.s32.totalorder %v606, 2
        %vm608 = vcmp.eq.s32.totalorder %v606, 0
        %v609 = vxor.u32 %v603, 2147483648
        %v610 = vsel %vm608, %v602, %v609
        %vm611 = vcmp.eq.s32.totalorder %v606, 2
        %v612 = vxor.u32 %v602, 2147483648
        %v613 = vsel %vm611, %v612, %v603
        %v614 = vsel %vm607, %v610, %v613
        %v615 = vsel %vm604, nan, %v614
        %616 = vst [vmem:[%s149] sm:$0xff] %v303
        %617 = vst [vmem:[%s149 + $0x8] sm:$0xff] %v407
        %618 = vst [vmem:[%s149 + $0x20] sm:$0xff] %v511
        %619 = vst [vmem:[%s149 + $0x28] sm:$0xff] %v615
        %v620 = vand.u32 2147483647, %v196
        %vm621 = vcmp.le.f32.partialorder %v620, 0.7853982
        %vm622 = vcmp.lt.s32.totalorder %v196, 0
        %v623 = vand.u32 %v196, 2139095040
        %v624 = vshrl.u32 %v623, 23
        %v625 = vsub.s32 %v624, 127
        %v626 = vand.u32 2147483647, %v196
        %v627 = vand.u32 %v626, 8388607
        %v628 = vor.u32 %v627, 8388608
        %v629 = vsub.s32 0, %v628
        %v630 = vadd.s32 %v625, 1
        %vm631 = vcmp.gt.s32.totalorder %v630, 0
        %v632 = vsel %vm631, %v630, 0
        %v633 = vshrl.u32 %v632, 5
        %v634 = vand.u32 %v632, 31
        %v635 = vsub.s32 32, %v634
        %v636 = vshrl.u32 683565275, %v635
        %v637 = vshll.u32 683565275, %v634
        %v638 = vshrl.u32 2475754826, %v635
        %v639 = vor.u32 %v637, %v638
        %v640 = vshll.u32 2475754826, %v634
        %v641 = vshrl.u32 2131351028, %v635
        %v642 = vor.u32 %v640, %v641
        %v643 = vshll.u32 2131351028, %v634
        %v644 = vshrl.u32 2102212464, %v635
        %v645 = vor.u32 %v643, %v644
        %v646 = vshll.u32 2102212464, %v634
        %v647 = vshrl.u32 920167782, %v635
        %v648 = vor.u32 %v646, %v647
        %v649 = vshll.u32 920167782, %v634
        %v650 = vshrl.u32 1326507024, %v635
        %v651 = vor.u32 %v649, %v650
        %vm652 = vcmp.lt.s32.totalorder %v633, 1
        %vm653 = vcmp.lt.s32.totalorder %v633, 2
        %vm654 = vcmp.lt.s32.totalorder %v633, 3
        %vm655 = vcmp.lt.s32.totalorder %v633, 4
        %v656 = vsel %vm652, %v636, %v639
        %v657 = vsel %vm655, %v645, 2102212464
        %v658 = vsel %vm654, %v642, %v657
        %v659 = vsel %vm653, %v656, %v658
        %v660 = vsel %vm652, %v639, %v642
        %v661 = vsel %vm655, %v648, 920167782
        %v662 = vsel %vm654, %v645, %v661
        %v663 = vsel %vm653, %v660, %v662
        %v664 = vsel %vm652, %v642, %v645
        %v665 = vsel %vm655, %v651, 1326507024
        %v666 = vsel %vm654, %v648, %v665
        %v667 = vsel %vm653, %v664, %v666
        %v668 = vshll.u32 %v628, 8
        %v669 = vmul.u32.u64.compose %v668, %v667
        %v670 = vextract.low.u32 %v669
        %v671 = vextract.high.u32 %v669
        %v672 = vmul.u32.u64.compose %v668, %v663
        %v673 = vextract.low.u32 %v672
        %v674 = vextract.high.u32 %v672
        %v675 = vmul.u32 %v668, %v659
        %v676 = vadd.s32 %v671, %v673
        %vm677 = vc.u32 %v671, %v673
        %v678 = vadd.s32 %v674, 1
        %v679 = vsel %vm677, %v678, %v674
        %v680 = vadd.s32 %v675, %v679
        %v681 = vadd.s32 %v680, 536870912
        %v682 = vshrl.u32 %v681, 30
        %v683 = vshll.u32 %v682, 30
        %v684 = vsub.s32 %v680, %v683
        %vm685 = vcmp.lt.s32.totalorder %v684, 0
        %v686 = vsub.s32 0, %v684
        %v687 = vsel %vm685, %v686, %v684
        %v688 = vclz %v687
        %v689 = vsub.s32 %v688, 2
        %vm690 = vcmp.gt.s32.totalorder 0, %v689
        %v691 = vsel %vm690, 0, %v689
        %v692 = vsub.s32 32, %v691
        %v693 = vshll.u32 %v684, %v691
        %v694 = vshrl.u32 %v676, %v692
        %v695 = vor.u32 %v693, %v694
        %v696 = vsub.s32 4294967266, %v691
        %v697 = vadd.s32 %v696, 127
        %v698 = vshll.u32 %v697, 23
        %v699 = vor.u32 4788187, %v698
        %v700 = vand.u32 2147483647, %v699
        %v702 = vcvt.s32.f32 %v695
        %v703 = vmul.f32 %v702, %v700
        %v704 = vxor.u32 %v703, 2147483648
        %v705 = vsel %vm622, %v704, %v703
        %v706 = vsub.s32 4, %v682
        %v707 = vsel %vm622, %v706, %v682
        %v708 = vsel %vm621, %v196, %v705
        %v709 = vsel %vm621, 0, %v707
        %v710 = vcosq.f32.pop %v708
        %v711 = vsinq.f32.pop %v708
        %vm712 = vweird.f32 %v196
        %v713 = vand.u32 %v709, 3
        %vm714 = vcmp.lt.s32.totalorder %v713, 2
        %vm715 = vcmp.eq.s32.totalorder %v713, 0
        %v716 = vxor.u32 %v711, 2147483648
        %v717 = vsel %vm715, %v710, %v716
        %vm718 = vcmp.eq.s32.totalorder %v713, 2
        %v719 = vxor.u32 %v710, 2147483648
        %v720 = vsel %vm718, %v719, %v711
        %v721 = vsel %vm714, %v717, %v720
        %v722 = vsel %vm712, nan, %v721
        %v723 = vand.u32 2147483647, %v197
        %vm724 = vcmp.le.f32.partialorder %v723, 0.7853982
        %vm725 = vcmp.lt.s32.totalorder %v197, 0
        %v726 = vand.u32 %v197, 2139095040
        %v727 = vshrl.u32 %v726, 23
        %v728 = vsub.s32 %v727, 127
        %v729 = vand.u32 2147483647, %v197
        %v730 = vand.u32 %v729, 8388607
        %v731 = vor.u32 %v730, 8388608
        %v732 = vsub.s32 0, %v731
        %v733 = vadd.s32 %v728, 1
        %vm734 = vcmp.gt.s32.totalorder %v733, 0
        %v735 = vsel %vm734, %v733, 0
        %v736 = vshrl.u32 %v735, 5
        %v737 = vand.u32 %v735, 31
        %v738 = vsub.s32 32, %v737
        %v739 = vshrl.u32 683565275, %v738
        %v740 = vshll.u32 683565275, %v737
        %v741 = vshrl.u32 2475754826, %v738
        %v742 = vor.u32 %v740, %v741
        %v743 = vshll.u32 2475754826, %v737
        %v744 = vshrl.u32 2131351028, %v738
        %v745 = vor.u32 %v743, %v744
        %v746 = vshll.u32 2131351028, %v737
        %v747 = vshrl.u32 2102212464, %v738
        %v748 = vor.u32 %v746, %v747
        %v749 = vshll.u32 2102212464, %v737
        %v750 = vshrl.u32 920167782, %v738
        %v751 = vor.u32 %v749, %v750
        %v752 = vshll.u32 920167782, %v737
        %v753 = vshrl.u32 1326507024, %v738
        %v754 = vor.u32 %v752, %v753
        %vm755 = vcmp.lt.s32.totalorder %v736, 1
        %vm756 = vcmp.lt.s32.totalorder %v736, 2
        %vm757 = vcmp.lt.s32.totalorder %v736, 3
        %vm758 = vcmp.lt.s32.totalorder %v736, 4
        %v759 = vsel %vm755, %v739, %v742
        %v760 = vsel %vm758, %v748, 2102212464
        %v761 = vsel %vm757, %v745, %v760
        %v762 = vsel %vm756, %v759, %v761
        %v763 = vsel %vm755, %v742, %v745
        %v764 = vsel %vm758, %v751, 920167782
        %v765 = vsel %vm757, %v748, %v764
        %v766 = vsel %vm756, %v763, %v765
        %v767 = vsel %vm755, %v745, %v748
        %v768 = vsel %vm758, %v754, 1326507024
        %v769 = vsel %vm757, %v751, %v768
        %v770 = vsel %vm756, %v767, %v769
        %v771 = vshll.u32 %v731, 8
        %v772 = vmul.u32.u64.compose %v771, %v770
        %v773 = vextract.low.u32 %v772
        %v774 = vextract.high.u32 %v772
        %v775 = vmul.u32.u64.compose %v771, %v766
        %v776 = vextract.low.u32 %v775
        %v777 = vextract.high.u32 %v775
        %v778 = vmul.u32 %v771, %v762
        %v779 = vadd.s32 %v774, %v776
        %vm780 = vc.u32 %v774, %v776
        %v781 = vadd.s32 %v777, 1
        %v782 = vsel %vm780, %v781, %v777
        %v783 = vadd.s32 %v778, %v782
        %v784 = vadd.s32 %v783, 536870912
        %v785 = vshrl.u32 %v784, 30
        %v786 = vshll.u32 %v785, 30
        %v787 = vsub.s32 %v783, %v786
        %vm788 = vcmp.lt.s32.totalorder %v787, 0
        %v789 = vsub.s32 0, %v787
        %v790 = vsel %vm788, %v789, %v787
        %v791 = vclz %v790
        %v792 = vsub.s32 %v791, 2
        %vm793 = vcmp.gt.s32.totalorder 0, %v792
        %v794 = vsel %vm793, 0, %v792
        %v795 = vsub.s32 32, %v794
        %v796 = vshll.u32 %v787, %v794
        %v797 = vshrl.u32 %v779, %v795
        %v798 = vor.u32 %v796, %v797
        %v799 = vsub.s32 4294967266, %v794
        %v800 = vadd.s32 %v799, 127
        %v801 = vshll.u32 %v800, 23
        %v802 = vor.u32 4788187, %v801
        %v803 = vand.u32 2147483647, %v802
        %v805 = vcvt.s32.f32 %v798
        %v806 = vmul.f32 %v805, %v803
        %v807 = vxor.u32 %v806, 2147483648
        %v808 = vsel %vm725, %v807, %v806
        %v809 = vsub.s32 4, %v785
        %v810 = vsel %vm725, %v809, %v785
        %v811 = vsel %vm724, %v197, %v808
        %v812 = vsel %vm724, 0, %v810
        %v813 = vcosq.f32.pop %v811
        %v814 = vsinq.f32.pop %v811
        %vm815 = vweird.f32 %v197
        %v816 = vand.u32 %v812, 3
        %vm817 = vcmp.lt.s32.totalorder %v816, 2
        %vm818 = vcmp.eq.s32.totalorder %v816, 0
        %v819 = vxor.u32 %v814, 2147483648
        %v820 = vsel %vm818, %v813, %v819
        %vm821 = vcmp.eq.s32.totalorder %v816, 2
        %v822 = vxor.u32 %v813, 2147483648
        %v823 = vsel %vm821, %v822, %v814
        %v824 = vsel %vm817, %v820, %v823
        %v825 = vsel %vm815, nan, %v824
        %v826 = vand.u32 2147483647, %v198
        %vm827 = vcmp.le.f32.partialorder %v826, 0.7853982
        %vm828 = vcmp.lt.s32.totalorder %v198, 0
        %v829 = vand.u32 %v198, 2139095040
        %v830 = vshrl.u32 %v829, 23
        %v831 = vsub.s32 %v830, 127
        %v832 = vand.u32 2147483647, %v198
        %v833 = vand.u32 %v832, 8388607
        %v834 = vor.u32 %v833, 8388608
        %v835 = vsub.s32 0, %v834
        %v836 = vadd.s32 %v831, 1
        %vm837 = vcmp.gt.s32.totalorder %v836, 0
        %v838 = vsel %vm837, %v836, 0
        %v839 = vshrl.u32 %v838, 5
        %v840 = vand.u32 %v838, 31
        %v841 = vsub.s32 32, %v840
        %v842 = vshrl.u32 683565275, %v841
        %v843 = vshll.u32 683565275, %v840
        %v844 = vshrl.u32 2475754826, %v841
        %v845 = vor.u32 %v843, %v844
        %v846 = vshll.u32 2475754826, %v840
        %v847 = vshrl.u32 2131351028, %v841
        %v848 = vor.u32 %v846, %v847
        %v849 = vshll.u32 2131351028, %v840
        %v850 = vshrl.u32 2102212464, %v841
        %v851 = vor.u32 %v849, %v850
        %v852 = vshll.u32 2102212464, %v840
        %v853 = vshrl.u32 920167782, %v841
        %v854 = vor.u32 %v852, %v853
        %v855 = vshll.u32 920167782, %v840
        %v856 = vshrl.u32 1326507024, %v841
        %v857 = vor.u32 %v855, %v856
        %vm858 = vcmp.lt.s32.totalorder %v839, 1
        %vm859 = vcmp.lt.s32.totalorder %v839, 2
        %vm860 = vcmp.lt.s32.totalorder %v839, 3
        %vm861 = vcmp.lt.s32.totalorder %v839, 4
        %v862 = vsel %vm858, %v842, %v845
        %v863 = vsel %vm861, %v851, 2102212464
        %v864 = vsel %vm860, %v848, %v863
        %v865 = vsel %vm859, %v862, %v864
        %v866 = vsel %vm858, %v845, %v848
        %v867 = vsel %vm861, %v854, 920167782
        %v868 = vsel %vm860, %v851, %v867
        %v869 = vsel %vm859, %v866, %v868
        %v870 = vsel %vm858, %v848, %v851
        %v871 = vsel %vm861, %v857, 1326507024
        %v872 = vsel %vm860, %v854, %v871
        %v873 = vsel %vm859, %v870, %v872
        %v874 = vshll.u32 %v834, 8
        %v875 = vmul.u32.u64.compose %v874, %v873
        %v876 = vextract.low.u32 %v875
        %v877 = vextract.high.u32 %v875
        %v878 = vmul.u32.u64.compose %v874, %v869
        %v879 = vextract.low.u32 %v878
        %v880 = vextract.high.u32 %v878
        %v881 = vmul.u32 %v874, %v865
        %v882 = vadd.s32 %v877, %v879
        %vm883 = vc.u32 %v877, %v879
        %v884 = vadd.s32 %v880, 1
        %v885 = vsel %vm883, %v884, %v880
        %v886 = vadd.s32 %v881, %v885
        %v887 = vadd.s32 %v886, 536870912
        %v888 = vshrl.u32 %v887, 30
        %v889 = vshll.u32 %v888, 30
        %v890 = vsub.s32 %v886, %v889
        %vm891 = vcmp.lt.s32.totalorder %v890, 0
        %v892 = vsub.s32 0, %v890
        %v893 = vsel %vm891, %v892, %v890
        %v894 = vclz %v893
        %v895 = vsub.s32 %v894, 2
        %vm896 = vcmp.gt.s32.totalorder 0, %v895
        %v897 = vsel %vm896, 0, %v895
        %v898 = vsub.s32 32, %v897
        %v899 = vshll.u32 %v890, %v897
        %v900 = vshrl.u32 %v882, %v898
        %v901 = vor.u32 %v899, %v900
        %v902 = vsub.s32 4294967266, %v897
        %v903 = vadd.s32 %v902, 127
        %v904 = vshll.u32 %v903, 23
        %v905 = vor.u32 4788187, %v904
        %v906 = vand.u32 2147483647, %v905
        %v908 = vcvt.s32.f32 %v901
        %v909 = vmul.f32 %v908, %v906
        %v910 = vxor.u32 %v909, 2147483648
        %v911 = vsel %vm828, %v910, %v909
        %v912 = vsub.s32 4, %v888
        %v913 = vsel %vm828, %v912, %v888
        %v914 = vsel %vm827, %v198, %v911
        %v915 = vsel %vm827, 0, %v913
        %v916 = vcosq.f32.pop %v914
        %v917 = vsinq.f32.pop %v914
        %vm918 = vweird.f32 %v198
        %v919 = vand.u32 %v915, 3
        %vm920 = vcmp.lt.s32.totalorder %v919, 2
        %vm921 = vcmp.eq.s32.totalorder %v919, 0
        %v922 = vxor.u32 %v917, 2147483648
        %v923 = vsel %vm921, %v916, %v922
        %vm924 = vcmp.eq.s32.totalorder %v919, 2
        %v925 = vxor.u32 %v916, 2147483648
        %v926 = vsel %vm924, %v925, %v917
        %v927 = vsel %vm920, %v923, %v926
        %v928 = vsel %vm918, nan, %v927
        %v929 = vand.u32 2147483647, %v199
        %vm930 = vcmp.le.f32.partialorder %v929, 0.7853982
        %vm931 = vcmp.lt.s32.totalorder %v199, 0
        %v932 = vand.u32 %v199, 2139095040
        %v933 = vshrl.u32 %v932, 23
        %v934 = vsub.s32 %v933, 127
        %v935 = vand.u32 2147483647, %v199
        %v936 = vand.u32 %v935, 8388607
        %v937 = vor.u32 %v936, 8388608
        %v938 = vsub.s32 0, %v937
        %v939 = vadd.s32 %v934, 1
        %vm940 = vcmp.gt.s32.totalorder %v939, 0
        %v941 = vsel %vm940, %v939, 0
        %v942 = vshrl.u32 %v941, 5
        %v943 = vand.u32 %v941, 31
        %v944 = vsub.s32 32, %v943
        %v945 = vshrl.u32 683565275, %v944
        %v946 = vshll.u32 683565275, %v943
        %v947 = vshrl.u32 2475754826, %v944
        %v948 = vor.u32 %v946, %v947
        %v949 = vshll.u32 2475754826, %v943
        %v950 = vshrl.u32 2131351028, %v944
        %v951 = vor.u32 %v949, %v950
        %v952 = vshll.u32 2131351028, %v943
        %v953 = vshrl.u32 2102212464, %v944
        %v954 = vor.u32 %v952, %v953
        %v955 = vshll.u32 2102212464, %v943
        %v956 = vshrl.u32 920167782, %v944
        %v957 = vor.u32 %v955, %v956
        %v958 = vshll.u32 920167782, %v943
        %v959 = vshrl.u32 1326507024, %v944
        %v960 = vor.u32 %v958, %v959
        %vm961 = vcmp.lt.s32.totalorder %v942, 1
        %vm962 = vcmp.lt.s32.totalorder %v942, 2
        %vm963 = vcmp.lt.s32.totalorder %v942, 3
        %vm964 = vcmp.lt.s32.totalorder %v942, 4
        %v965 = vsel %vm961, %v945, %v948
        %v966 = vsel %vm964, %v954, 2102212464
        %v967 = vsel %vm963, %v951, %v966
        %v968 = vsel %vm962, %v965, %v967
        %v969 = vsel %vm961, %v948, %v951
        %v970 = vsel %vm964, %v957, 920167782
        %v971 = vsel %vm963, %v954, %v970
        %v972 = vsel %vm962, %v969, %v971
        %v973 = vsel %vm961, %v951, %v954
        %v974 = vsel %vm964, %v960, 1326507024
        %v975 = vsel %vm963, %v957, %v974
        %v976 = vsel %vm962, %v973, %v975
        %v977 = vshll.u32 %v937, 8
        %v978 = vmul.u32.u64.compose %v977, %v976
        %v979 = vextract.low.u32 %v978
        %v980 = vextract.high.u32 %v978
        %v981 = vmul.u32.u64.compose %v977, %v972
        %v982 = vextract.low.u32 %v981
        %v983 = vextract.high.u32 %v981
        %v984 = vmul.u32 %v977, %v968
        %v985 = vadd.s32 %v980, %v982
        %vm986 = vc.u32 %v980, %v982
        %v987 = vadd.s32 %v983, 1
        %v988 = vsel %vm986, %v987, %v983
        %v989 = vadd.s32 %v984, %v988
        %v990 = vadd.s32 %v989, 536870912
        %v991 = vshrl.u32 %v990, 30
        %v992 = vshll.u32 %v991, 30
        %v993 = vsub.s32 %v989, %v992
        %vm994 = vcmp.lt.s32.totalorder %v993, 0
        %v995 = vsub.s32 0, %v993
        %v996 = vsel %vm994, %v995, %v993
        %v997 = vclz %v996
        %v998 = vsub.s32 %v997, 2
        %vm999 = vcmp.gt.s32.totalorder 0, %v998
        %v1000 = vsel %vm999, 0, %v998
        %v1001 = vsub.s32 32, %v1000
        %v1002 = vshll.u32 %v993, %v1000
        %v1003 = vshrl.u32 %v985, %v1001
        %v1004 = vor.u32 %v1002, %v1003
        %v1005 = vsub.s32 4294967266, %v1000
        %v1006 = vadd.s32 %v1005, 127
        %v1007 = vshll.u32 %v1006, 23
        %v1008 = vor.u32 4788187, %v1007
        %v1009 = vand.u32 2147483647, %v1008
        %v1011 = vcvt.s32.f32 %v1004
        %v1012 = vmul.f32 %v1011, %v1009
        %v1013 = vxor.u32 %v1012, 2147483648
        %v1014 = vsel %vm931, %v1013, %v1012
        %v1015 = vsub.s32 4, %v991
        %v1016 = vsel %vm931, %v1015, %v991
        %v1017 = vsel %vm930, %v199, %v1014
        %v1018 = vsel %vm930, 0, %v1016
        %v1019 = vcosq.f32.pop %v1017
        %v1020 = vsinq.f32.pop %v1017
        %vm1021 = vweird.f32 %v199
        %v1022 = vand.u32 %v1018, 3
        %vm1023 = vcmp.lt.s32.totalorder %v1022, 2
        %vm1024 = vcmp.eq.s32.totalorder %v1022, 0
        %v1025 = vxor.u32 %v1020, 2147483648
        %v1026 = vsel %vm1024, %v1019, %v1025
        %vm1027 = vcmp.eq.s32.totalorder %v1022, 2
        %v1028 = vxor.u32 %v1019, 2147483648
        %v1029 = vsel %vm1027, %v1028, %v1020
        %v1030 = vsel %vm1023, %v1026, %v1029
        %v1031 = vsel %vm1021, nan, %v1030
        %1032 = vst [vmem:[%s149 + $0x10] sm:$0xff] %v722
        %1033 = vst [vmem:[%s149 + $0x18] sm:$0xff] %v825
        %1034 = vst [vmem:[%s149 + $0x30] sm:$0xff] %v928
        %1035 = vst [vmem:[%s149 + $0x38] sm:$0xff] %v1031
        %s1036 = sand.u32 %s68, 1
        %s1037 = scalar_lea.sflag [#allocation4], %s1036
        %s1038 = sand.u32 %s68, 1
        %s1039 = smul.addr %s1038, 64
        %s1040 = scalar_lea.vmem [#allocation5], %s1039
        // Predicated region
        $region29: #{tpu_custom_call.1} parent=23 // pred_check
          %p1041 = pneg %p78
        $region30: #{tpu_custom_call.1} parent=23 // pred_check_branch
          %1043 = sbr.rel (%p1041) target = $region32
        $region31: #{tpu_custom_call.1} parent=23 // pred_region
          %s1044 = smul.u32 2, %s22
          %s1046 = ssub.s32 1024, 1024
          %1047 = vsyncadd %s1037, %s1046
          %s1048 = smul.addr %s1044, 8
          %s1049 = sadd.s32 %s23, %s1048
          %s1050 = smul.addr %s1049, 128
          %s1051 = scalar_lea.hbm %s1, %s1050
          %s1052 = sshll.u32 %s1040, 4
          %s1053 = int_to_ptr.vmem [resolvable:$true] %s1052
          %1058 = dma.vmem_to_hbm [thread:$0]  %s1053, 1024, %s1051, %s1037, 128, 256, 8
        $region32: #{tpu_custom_call.1} parent=23 // pred_fallthru
          _
      $region24: #{tpu_custom_call.1} parent=5 // pred_fallthru
        _
      %p1059 = scmp.le.s32.totalorder 2, %s13
      // Predicated region
      $region33: #{tpu_custom_call.1} parent=5 // pred_check
        %p1060 = pneg %p1059
      $region34: #{tpu_custom_call.1} parent=5 // pred_check_branch
        %1062 = sbr.rel (%p1060) target = $region36
      $region35: #{tpu_custom_call.1} parent=5 // pred_region
        %s1063 = ssub.s32 %s13, 2
        // Predicated region
        $region37: #{tpu_custom_call.1} parent=35 // pred_check
          %p1064 = pneg %p84
        $region38: #{tpu_custom_call.1} parent=35 // pred_check_branch
          %1066 = sbr.rel (%p1064) target = $region40
        $region39: #{tpu_custom_call.1} parent=35 // pred_region
          %s1067 = sand.u32 %s69, 1
          %s1068 = scalar_lea.sflag [#allocation4], %s1067
          %s1069 = sand.u32 %s69, 1
          %s1070 = smul.addr %s1069, 64
          %s1071 = scalar_lea.vmem [#allocation5], %s1070
          %1072 = dma.done %s1068, 1024
        $region40: #{tpu_custom_call.1} parent=35 // pred_fallthru
          _
      $region36: #{tpu_custom_call.1} parent=5 // pred_fallthru
        _
    $region6: #{tpu_custom_call.1} parent=1 // loop_footer
      %s17 = sadd.s32 1, %s13
    $region7: #{tpu_custom_call.1} parent=1 // loop_footer_branch
      %12 = sbr.rel target = $region3
    $region8: #{tpu_custom_call.1} parent=1 // loop_exit
      _
    %1073 = vsyncpa [#allocation3], 1
    %s1074 = scalar_lea.sflag [#allocation3], 1
    %1075 = vsyncpa %s1074, 1
    %1076 = vsyncpa [#allocation4], 1
    %s1077 = scalar_lea.sflag [#allocation4], 1
    %1078 = vsyncpa %s1077, 1

</llo_original>
